<compile_context>
chip_gen: v5e
topology: v5e:2x2
jax: 0.10.0
libtpu: 0.0.40
codegen_flags: <defaults>
</compile_context>

<pallas_src>
import functools

import jax
import jax.numpy as jnp
from jax.experimental import pallas as pl
from jax.experimental.pallas import tpu as pltpu


def _round_up(x, m):
    return ((x + m - 1) // m) * m


def _mlp_kernel(x_ref, w1_ref, b1_ref, w2_ref, b2_ref, w3_ref, b3_ref, o_ref):
    # Entire 3-layer MLP fused, one batch tile per grid step.
    # feats arrive f32; cast to bf16 in-kernel (free VPU filler under MXU/DMA slack).
    x = x_ref[...].astype(jnp.bfloat16)                                 # (bb, F)   bf16

    h1 = jnp.dot(x, w1_ref[...], preferred_element_type=jnp.float32)   # (bb, H1)  f32
    h1 = jnp.maximum(h1 + b1_ref[...], 0.0)                            # ReLU in f32

    h2 = jnp.dot(h1.astype(jnp.bfloat16), w2_ref[...],
                 preferred_element_type=jnp.float32)                   # (bb, H2)  f32
    h2 = jnp.maximum(h2 + b2_ref[...], 0.0)

    out = jnp.dot(h2.astype(jnp.bfloat16), w3_ref[...],
                  preferred_element_type=jnp.float32)                  # (bb, Cp)  f32
    o_ref[...] = (out + b3_ref[...]).astype(o_ref.dtype)               # bf16 lane-dense store


@functools.partial(jax.jit, static_argnames=("block_b",))
def nn_forward(feats, w1, b1, w2, b2, w3, b3, *, block_b=1024):
    """feats: (B, F) float32 -> (B, C) bfloat16 logits.

    block_b: batch tile size (sweep 1024-2048 for very large B; on v6e's
    128 MiB VMEM up to 4096 is safe).  The tile is re-derived from B so the
    grid has >= 2 steps whenever there is enough batch (v7x has 2 TensorCores
    sharing the parallel grid axis) and batch padding stays <= a few rows.
    """
    B, F = feats.shape
    H1 = w1.shape[1]          # 512
    H2 = w2.shape[1]          # 256
    C = w3.shape[1]           # numClasses

    # ---- batch tiling: minimal padding, balanced grid -----------------------
    B8 = _round_up(B, 8)
    bb_cap = _round_up(min(block_b, B8), 8)
    n_steps = pl.cdiv(B8, bb_cap)
    # v7x megacore: prefer >= 2 grid steps once each tile is still >= 256 rows
    # (per-step overhead ~0.35us stays well amortized).
    if n_steps == 1 and B8 >= 512:
        n_steps = 2
    bb = _round_up(pl.cdiv(B8, n_steps), 8)
    B_pad = n_steps * bb                      # exceeds B by < n_steps*8 + 7 rows

    # Lane-dense output: pad classes up to a multiple of 128 lanes.
    C_pad = _round_up(C, 128)

    # feats stay f32 (bf16 cast happens in-kernel); pad batch only if needed.
    x = feats if B_pad == B else jnp.pad(feats, ((0, B_pad - B), (0, 0)))

    # bf16 weights (MXU native); biases stay f32.
    w1b = w1.astype(jnp.bfloat16)
    w2b = w2.astype(jnp.bfloat16)
    w3b = jnp.pad(w3.astype(jnp.bfloat16), ((0, 0), (0, C_pad - C)))
    b1f = b1.reshape(1, H1).astype(jnp.float32)
    b2f = b2.reshape(1, H2).astype(jnp.float32)
    b3f = jnp.pad(b3.reshape(1, C).astype(jnp.float32), ((0, 0), (0, C_pad - C)))

    grid = (n_steps,)

    # Advisory cost for XLA scheduling around the custom call.
    flops = 2 * B_pad * (F * H1 + H1 * H2 + H2 * C_pad)
    bytes_accessed = (
        x.size * 4                                       # f32 feats read
        + (w1b.size + w2b.size + w3b.size) * 2           # bf16 weights
        + (b1f.size + b2f.size + b3f.size) * 4           # f32 biases
        + B_pad * C_pad * 2                              # bf16 output write
    )
    cost = pl.CostEstimate(flops=flops, transcendentals=0,
                           bytes_accessed=bytes_accessed)

    # VMEM estimate: narrow tiles are stored 128-lanes wide in VMEM.
    lane = 128
    per_row_bytes = (
        2 * max(F, lane) * 4                  # x tile f32, lane-padded, double-buffered
        + 2 * C_pad * 2                       # out tile bf16, double-buffered
        + (H1 + H2) * 4                       # f32 h1/h2 intermediates
        + (max(F, lane) + H1 + H2) * 2        # bf16 casts of x/h1/h2
    )
    weights_bytes = 2 * ((F * H1 + H1 * H2 + H2 * C_pad) * 2
                         + (H1 + H2 + C_pad) * 4)        # counted double-buffered
    vmem_bytes = bb * per_row_bytes + weights_bytes
    vmem_limit = int(min(48 * 1024 * 1024, max(32 * 1024 * 1024, 2 * vmem_bytes)))

    out_pad = pl.pallas_call(
        _mlp_kernel,
        out_shape=jax.ShapeDtypeStruct((B_pad, C_pad), jnp.bfloat16),
        grid_spec=pl.GridSpec(
            grid=grid,
            in_specs=[
                pl.BlockSpec((bb, F), lambda i: (i, 0)),       # x tile (f32)
                pl.BlockSpec((F, H1), lambda i: (0, 0)),       # W1 (resident)
                pl.BlockSpec((1, H1), lambda i: (0, 0)),       # b1
                pl.BlockSpec((H1, H2), lambda i: (0, 0)),      # W2
                pl.BlockSpec((1, H2), lambda i: (0, 0)),       # b2
                pl.BlockSpec((H2, C_pad), lambda i: (0, 0)),   # W3 (padded to 128 lanes)
                pl.BlockSpec((1, C_pad), lambda i: (0, 0)),    # b3
            ],
            out_specs=pl.BlockSpec((bb, C_pad), lambda i: (i, 0)),
        ),
        compiler_params=pltpu.CompilerParams(
            dimension_semantics=("parallel",),
            vmem_limit_bytes=vmem_limit,
        ),
        cost_estimate=cost,
    )(x, w1b, b1f, w2b, b2f, w3b, b3f)

    # TODO(synk): if the consumer can handle the (B_pad, C_pad) padded slab
    # directly, return out_pad and drop this slice pass entirely.
    return out_pad[:B, :C]


def init_params(key, num_feats, num_classes):
    """Deterministic init mimicking PyTorch nn.Linear default (uniform +-1/sqrt(fan_in)).
    Weights are stored as (in, out) = PyTorch weight.T."""
    dims = [(num_feats, 512), (512, 256), (256, num_classes)]
    params = []
    for (fan_in, fan_out) in dims:
        key, kw, kb = jax.random.split(key, 3)
        bound = 1.0 / jnp.sqrt(fan_in)
        w = jax.random.uniform(kw, (fan_in, fan_out), jnp.float32, -bound, bound)
        b = jax.random.uniform(kb, (1, fan_out), jnp.float32, -bound, bound)
        params += [w, b]
    return params


def reference_forward(feats, w1, b1, w2, b2, w3, b3):
    # Mirrors the kernel's bf16-matmul / f32-accumulate numerics.
    x = feats.astype(jnp.bfloat16)
    h1 = jnp.dot(x, w1.astype(jnp.bfloat16), preferred_element_type=jnp.float32) + b1
    h1 = jnp.maximum(h1, 0.0)
    h2 = jnp.dot(h1.astype(jnp.bfloat16), w2.astype(jnp.bfloat16),
                 preferred_element_type=jnp.float32) + b2
    h2 = jnp.maximum(h2, 0.0)
    return jnp.dot(h2.astype(jnp.bfloat16), w3.astype(jnp.bfloat16),
                   preferred_element_type=jnp.float32) + b3


if __name__ == "__main__":
    NUM_FEATS = 32
    NUM_CLASSES = 16
    BATCH = 8

    key = jax.random.PRNGKey(0)
    key, kx = jax.random.split(key)
    feats = jax.random.normal(kx, (BATCH, NUM_FEATS), jnp.float32)

    w1, b1, w2, b2, w3, b3 = init_params(key, NUM_FEATS, NUM_CLASSES)

    out = nn_forward(feats, w1, b1, w2, b2, w3, b3)
    out = jax.block_until_ready(out)

    ref = reference_forward(feats, w1, b1, w2, b2, w3, b3)   # f32
    assert out.shape == (BATCH, NUM_CLASSES)
    # Kernel returns bf16 logits; compare in f32 at bf16-appropriate tolerance.
    assert jnp.allclose(out.astype(jnp.float32), ref, atol=1e-2, rtol=1e-2), \
        "mismatch vs JAX reference"

    print("KERNEL_OK")
</pallas_src>

<mosaic_0001>
module attributes {stable_mosaic.version = 11 : i64} {
  func.func @_mlp_kernel(%arg0: i32, %arg1: memref<8x32xf32, #tpu.memory_space<vmem>>, %arg2: memref<32x512xbf16, #tpu.memory_space<vmem>>, %arg3: memref<1x512xf32, #tpu.memory_space<vmem>>, %arg4: memref<512x256xbf16, #tpu.memory_space<vmem>>, %arg5: memref<1x256xf32, #tpu.memory_space<vmem>>, %arg6: memref<256x128xbf16, #tpu.memory_space<vmem>>, %arg7: memref<1x128xf32, #tpu.memory_space<vmem>>, %arg8: memref<8x128xbf16, #tpu.memory_space<vmem>>) attributes {dimension_semantics = [#tpu.dimension_semantics<parallel>], iteration_bounds = array<i64: 1>, scalar_prefetch = 0 : i64, scratch_operands = 0 : i64, tpu.core_type = #tpu.core_type<tc>, window_params = [{transform_indices = @transform_0, window_bounds = array<i64: 8, 32>}, {pipeline_mode = #tpu.pipeline_mode<synchronous>, transform_indices = @transform_1, window_bounds = array<i64: 32, 512>}, {pipeline_mode = #tpu.pipeline_mode<synchronous>, transform_indices = @transform_2, window_bounds = array<i64: 1, 512>}, {pipeline_mode = #tpu.pipeline_mode<synchronous>, transform_indices = @transform_3, window_bounds = array<i64: 512, 256>}, {pipeline_mode = #tpu.pipeline_mode<synchronous>, transform_indices = @transform_4, window_bounds = array<i64: 1, 256>}, {pipeline_mode = #tpu.pipeline_mode<synchronous>, transform_indices = @transform_5, window_bounds = array<i64: 256, 128>}, {pipeline_mode = #tpu.pipeline_mode<synchronous>, transform_indices = @transform_6, window_bounds = array<i64: 1, 128>}, {transform_indices = @transform_7, window_bounds = array<i64: 8, 128>}]} {
    %c0 = arith.constant 0 : index
    %c0_0 = arith.constant 0 : index
    %0 = vector.load %arg1[%c0, %c0_0] : memref<8x32xf32, #tpu.memory_space<vmem>>, vector<8x32xf32>
    %1 = arith.truncf %0 : vector<8x32xf32> to vector<8x32xbf16>
    %c0_1 = arith.constant 0 : index
    %c0_2 = arith.constant 0 : index
    %2 = vector.load %arg2[%c0_1, %c0_2] : memref<32x512xbf16, #tpu.memory_space<vmem>>, vector<32x512xbf16>
    %cst = arith.constant dense<0.000000e+00> : vector<8x512xf32>
    %3 = tpu.matmul %1, %2, %cst {dimension_numbers = #tpu.dot_dimension_numbers<[1], [0], [0], [1], [0, 0, 1, 1], [], []>} : vector<8x32xbf16>, vector<32x512xbf16>, vector<8x512xf32> -> vector<8x512xf32>
    %c0_3 = arith.constant 0 : index
    %c0_4 = arith.constant 0 : index
    %4 = vector.load %arg3[%c0_3, %c0_4] : memref<1x512xf32, #tpu.memory_space<vmem>>, vector<1x512xf32>
    %5 = vector.broadcast %4 : vector<1x512xf32> to vector<8x512xf32>
    %6 = arith.addf %3, %5 : vector<8x512xf32>
    %cst_5 = arith.constant 0.000000e+00 : f32
    %7 = vector.broadcast %cst_5 : f32 to vector<8x512xf32>
    %8 = arith.maximumf %6, %7 : vector<8x512xf32>
    %9 = arith.truncf %8 : vector<8x512xf32> to vector<8x512xbf16>
    %c0_6 = arith.constant 0 : index
    %c0_7 = arith.constant 0 : index
    %10 = vector.load %arg4[%c0_6, %c0_7] : memref<512x256xbf16, #tpu.memory_space<vmem>>, vector<512x256xbf16>
    %cst_8 = arith.constant dense<0.000000e+00> : vector<8x256xf32>
    %11 = tpu.matmul %9, %10, %cst_8 {dimension_numbers = #tpu.dot_dimension_numbers<[1], [0], [0], [1], [0, 0, 1, 1], [], []>} : vector<8x512xbf16>, vector<512x256xbf16>, vector<8x256xf32> -> vector<8x256xf32>
    %c0_9 = arith.constant 0 : index
    %c0_10 = arith.constant 0 : index
    %12 = vector.load %arg5[%c0_9, %c0_10] : memref<1x256xf32, #tpu.memory_space<vmem>>, vector<1x256xf32>
    %13 = vector.broadcast %12 : vector<1x256xf32> to vector<8x256xf32>
    %14 = arith.addf %11, %13 : vector<8x256xf32>
    %cst_11 = arith.constant 0.000000e+00 : f32
    %15 = vector.broadcast %cst_11 : f32 to vector<8x256xf32>
    %16 = arith.maximumf %14, %15 : vector<8x256xf32>
    %17 = arith.truncf %16 : vector<8x256xf32> to vector<8x256xbf16>
    %c0_12 = arith.constant 0 : index
    %c0_13 = arith.constant 0 : index
    %18 = vector.load %arg6[%c0_12, %c0_13] : memref<256x128xbf16, #tpu.memory_space<vmem>>, vector<256x128xbf16>
    %cst_14 = arith.constant dense<0.000000e+00> : vector<8x128xf32>
    %19 = tpu.matmul %17, %18, %cst_14 {dimension_numbers = #tpu.dot_dimension_numbers<[1], [0], [0], [1], [0, 0, 1, 1], [], []>} : vector<8x256xbf16>, vector<256x128xbf16>, vector<8x128xf32> -> vector<8x128xf32>
    %c0_15 = arith.constant 0 : index
    %c0_16 = arith.constant 0 : index
    %20 = vector.load %arg7[%c0_15, %c0_16] : memref<1x128xf32, #tpu.memory_space<vmem>>, vector<1x128xf32>
    %21 = vector.broadcast %20 : vector<1x128xf32> to vector<8x128xf32>
    %22 = arith.addf %19, %21 : vector<8x128xf32>
    %23 = arith.truncf %22 : vector<8x128xf32> to vector<8x128xbf16>
    %c0_17 = arith.constant 0 : index
    %c0_18 = arith.constant 0 : index
    %24 = vector.load %arg8[%c0_17, %c0_18] : memref<8x128xbf16, #tpu.memory_space<vmem>>, vector<8x128xbf16>
    tpu.vector_store %arg8[%c0_17, %c0_18], %23 {strides = array<i32>} : memref<8x128xbf16, #tpu.memory_space<vmem>>, vector<8x128xbf16>,
    return
  }
  func.func @transform_0(%arg0: i32) -> (i32, i32) {
    %c0_i32 = arith.constant 0 : i32
    %c0_i32_0 = arith.constant 0 : i32
    return %arg0, %c0_i32 : i32, i32
  }
  func.func @transform_1(%arg0: i32) -> (i32, i32) {
    %c0_i32 = arith.constant 0 : i32
    %c0_i32_0 = arith.constant 0 : i32
    %c0_i32_1 = arith.constant 0 : i32
    return %c0_i32, %c0_i32_0 : i32, i32
  }
  func.func @transform_2(%arg0: i32) -> (i32, i32) {
    %c0_i32 = arith.constant 0 : i32
    %c0_i32_0 = arith.constant 0 : i32
    %c0_i32_1 = arith.constant 0 : i32
    return %c0_i32, %c0_i32_0 : i32, i32
  }
  func.func @transform_3(%arg0: i32) -> (i32, i32) {
    %c0_i32 = arith.constant 0 : i32
    %c0_i32_0 = arith.constant 0 : i32
    %c0_i32_1 = arith.constant 0 : i32
    return %c0_i32, %c0_i32_0 : i32, i32
  }
  func.func @transform_4(%arg0: i32) -> (i32, i32) {
    %c0_i32 = arith.constant 0 : i32
    %c0_i32_0 = arith.constant 0 : i32
    %c0_i32_1 = arith.constant 0 : i32
    return %c0_i32, %c0_i32_0 : i32, i32
  }
  func.func @transform_5(%arg0: i32) -> (i32, i32) {
    %c0_i32 = arith.constant 0 : i32
    %c0_i32_0 = arith.constant 0 : i32
    %c0_i32_1 = arith.constant 0 : i32
    return %c0_i32, %c0_i32_0 : i32, i32
  }
  func.func @transform_6(%arg0: i32) -> (i32, i32) {
    %c0_i32 = arith.constant 0 : i32
    %c0_i32_0 = arith.constant 0 : i32
    %c0_i32_1 = arith.constant 0 : i32
    return %c0_i32, %c0_i32_0 : i32, i32
  }
  func.func @transform_7(%arg0: i32) -> (i32, i32) {
    %c0_i32 = arith.constant 0 : i32
    %c0_i32_0 = arith.constant 0 : i32
    return %arg0, %c0_i32 : i32, i32
  }
}

</mosaic_0001>

<llo_original>
// kernel: nn_forward.1
$region0: #{nn_forward.1}
  #allocation0 [shape = 'u32[]', space=smem, size = 0x4, offset = 0x4, fixed_abs, tag = 'smem constant byte address 0x4 - core index']
  #allocation1 [shape = 'u32[72,128]{1,0:T(1,128)}', space=vmem, size = 0x9000, scoped, tag = 'internal scratch']
  %s0 = inlined_call_operand.vmem [shape: f32[8,32], index: 0, kind: input, shape index: {}]
  %s1 = inlined_call_operand.vmem [shape: bf16[32,512], index: 1, kind: input, shape index: {}]
  %s2 = inlined_call_operand.vmem [shape: f32[1,512], index: 2, kind: input, shape index: {}]
  %s3 = inlined_call_operand.vmem [shape: bf16[512,256], index: 3, kind: input, shape index: {}]
  %s4 = inlined_call_operand.vmem [shape: f32[1,256], index: 4, kind: input, shape index: {}]
  %s5 = inlined_call_operand.vmem [shape: bf16[256,128], index: 5, kind: input, shape index: {}]
  %s6 = inlined_call_operand.vmem [shape: f32[1,128], index: 6, kind: input, shape index: {}]
  %s7 = inlined_call_operand.hbm [shape: bf16[8,128], index: 7, kind: output, shape index: {}]
  %s8 = sld [smem:[#allocation0]]
  $region38: #{nn_forward.1} parent=0
    _
  %s10 = ssub.s32 1, %s8
  %s11 = scalar_select 0, %s10, %s8
  $region1: #{nn_forward.1} parent=0
    #allocation2 [shape = 'u8[2048]{0}', space=vmem, size = 0x800, scoped, tag = 'output window, operand 0, single buffered']
    #allocation3 [shape = 's32[1]{0}', space=sflag, size = 0x4, scoped, tag = 'scoped memory for nn_forward.1']
    %12 = vsyncpa [#allocation3], 0
    // Predicated region
    $region2: #{nn_forward.1} parent=1 // pred_check
      _
    $region3: #{nn_forward.1} parent=1 // pred_check_branch
      %14 = sbr.rel (0) target = $region5
    $region4: #{nn_forward.1} parent=1 // pred_region
      _
    $region5: #{nn_forward.1} parent=1 // pred_fallthru
      _
    // Predicated region
    $region6: #{nn_forward.1} parent=1 // pred_check
      _
    $region7: #{nn_forward.1} parent=1 // pred_check_branch
      %16 = sbr.rel (0) target = $region9
    $region8: #{nn_forward.1} parent=1 // pred_region
      _
    $region9: #{nn_forward.1} parent=1 // pred_fallthru
      _
    // Predicated region
    $region10: #{nn_forward.1} parent=1 // pred_check
      _
    $region11: #{nn_forward.1} parent=1 // pred_check_branch
      %18 = sbr.rel (0) target = $region13
    $region12: #{nn_forward.1} parent=1 // pred_region
      _
    $region13: #{nn_forward.1} parent=1 // pred_fallthru
      _
    // Predicated region
    $region14: #{nn_forward.1} parent=1 // pred_check
      _
    $region15: #{nn_forward.1} parent=1 // pred_check_branch
      %20 = sbr.rel (0) target = $region17
    $region16: #{nn_forward.1} parent=1 // pred_region
      _
    $region17: #{nn_forward.1} parent=1 // pred_fallthru
      _
    // Predicated region
    $region18: #{nn_forward.1} parent=1 // pred_check
      _
    $region19: #{nn_forward.1} parent=1 // pred_check_branch
      %22 = sbr.rel (0) target = $region21
    $region20: #{nn_forward.1} parent=1 // pred_region
      _
    $region21: #{nn_forward.1} parent=1 // pred_fallthru
      _
    // Predicated region
    $region22: #{nn_forward.1} parent=1 // pred_check
      _
    $region23: #{nn_forward.1} parent=1 // pred_check_branch
      %24 = sbr.rel (0) target = $region25
    $region24: #{nn_forward.1} parent=1 // pred_region
      _
    $region25: #{nn_forward.1} parent=1 // pred_fallthru
      _
    // Predicated region
    $region26: #{nn_forward.1} parent=1 // pred_check
      _
    $region27: #{nn_forward.1} parent=1 // pred_check_branch
      %26 = sbr.rel (0) target = $region29
    $region28: #{nn_forward.1} parent=1 // pred_region
      _
    $region29: #{nn_forward.1} parent=1 // pred_fallthru
      _
    %v28 = vld [vmem:[%s0] sm:$0xff]
    %v29 = vpack.c.bf16 %v28, %v28
    %v30 = vld [vmem:[%s1] sm:$0xff]
    %v31 = vld [vmem:[%s1 + $0x8] sm:$0xff]
    %v32 = vld [vmem:[%s1 + $0x10] sm:$0xff]
    %v33 = vld [vmem:[%s1 + $0x18] sm:$0xff]
    %v34 = vld [vmem:[%s1 + $0x20] sm:$0xff]
    %v35 = vld [vmem:[%s1 + $0x28] sm:$0xff]
    %v36 = vld [vmem:[%s1 + $0x30] sm:$0xff]
    %v37 = vld [vmem:[%s1 + $0x38] sm:$0xff]
    %v38 = vld [vmem:[%s2] sm:$0xf]
    %v40 = vperm.slane %v38, 0
    %v41 = vperm.slane %v38, 1
    %v42 = vperm.slane %v38, 2
    %v43 = vperm.slane %v38, 3
    %v56 = vunpack.c.l.b16 %v30
    %v57 = vunpack.c.h.b16 %v30
    %v58 = vunpack.c.l.b16 %v31
    %v59 = vunpack.c.h.b16 %v31
    %v60 = vunpack.c.l.b16 %v32
    %v61 = vunpack.c.h.b16 %v32
    %v62 = vunpack.c.l.b16 %v33
    %v63 = vunpack.c.h.b16 %v33
    %v64 = vunpack.c.l.b16 %v34
    %v65 = vunpack.c.h.b16 %v34
    %v66 = vunpack.c.l.b16 %v35
    %v67 = vunpack.c.h.b16 %v35
    %v68 = vunpack.c.l.b16 %v36
    %v69 = vunpack.c.h.b16 %v36
    %v70 = vunpack.c.l.b16 %v37
    %v71 = vunpack.c.h.b16 %v37
    %v72 = vpack.c.b16 %v60, %v56
    %v73 = vpack.c.b16 %v61, %v57
    %v74 = vpack.c.b16 %v62, %v58
    %v75 = vpack.c.b16 %v63, %v59
    %v76 = vpack.c.b16 %v68, %v64
    %v77 = vpack.c.b16 %v69, %v65
    %v78 = vpack.c.b16 %v70, %v66
    %v79 = vpack.c.b16 %v71, %v67
    %vm88 = vcmask 261120
    %v90 = vsel %vm88, %v29, 0
    %92 = vmatpush.bf16.msra.mxu0 0
    %93 = vmatpush.bf16.msra.mxu0 0
    %94 = vmatpush.bf16.msra.mxu0 0
    %95 = vmatpush.bf16.msra.mxu0 0
    %96 = vmatpush.bf16.msra.mxu0 0
    %97 = vmatpush.bf16.msra.mxu0 0
    %98 = vmatpush.bf16.msra.mxu0 %v76
    %99 = vmatpush.bf16.msra.mxu0 %v72
    %100 = vmatmul.bf16.gmra.mxu0 %v90
    %v101 = vpop.f32.mrf.mxu0
    %v102 = vadd.f32 %v40, %v101
    %v103 = vpop.f32.mrf.mxu0
    %104 = vdwg.mxu0
    %105 = vmatpush.bf16.msra.mxu0 0
    %106 = vmatpush.bf16.msra.mxu0 0
    %107 = vmatpush.bf16.msra.mxu0 0
    %108 = vmatpush.bf16.msra.mxu0 0
    %109 = vmatpush.bf16.msra.mxu0 0
    %110 = vmatpush.bf16.msra.mxu0 0
    %111 = vmatpush.bf16.msra.mxu0 %v77
    %112 = vmatpush.bf16.msra.mxu0 %v73
    %113 = vmatmul.bf16.gmra.mxu0 %v90
    %v114 = vpop.f32.mrf.mxu0
    %v115 = vadd.f32 %v41, %v114
    %v116 = vpop.f32.mrf.mxu0
    %117 = vdwg.mxu0
    %118 = vmatpush.bf16.msra.mxu0 0
    %119 = vmatpush.bf16.msra.mxu0 0
    %120 = vmatpush.bf16.msra.mxu0 0
    %121 = vmatpush.bf16.msra.mxu0 0
    %122 = vmatpush.bf16.msra.mxu0 0
    %123 = vmatpush.bf16.msra.mxu0 0
    %124 = vmatpush.bf16.msra.mxu0 %v78
    %125 = vmatpush.bf16.msra.mxu0 %v74
    %126 = vmatmul.bf16.gmra.mxu0 %v90
    %v127 = vpop.f32.mrf.mxu0
    %v128 = vadd.f32 %v42, %v127
    %v129 = vpop.f32.mrf.mxu0
    %130 = vdwg.mxu0
    %131 = vmatpush.bf16.msra.mxu0 0
    %132 = vmatpush.bf16.msra.mxu0 0
    %133 = vmatpush.bf16.msra.mxu0 0
    %134 = vmatpush.bf16.msra.mxu0 0
    %135 = vmatpush.bf16.msra.mxu0 0
    %136 = vmatpush.bf16.msra.mxu0 0
    %137 = vmatpush.bf16.msra.mxu0 %v79
    %138 = vmatpush.bf16.msra.mxu0 %v75
    %139 = vmatmul.bf16.gmra.mxu0 %v90
    %v140 = vpop.f32.mrf.mxu0
    %v141 = vadd.f32 %v43, %v140
    %v142 = vpop.f32.mrf.mxu0
    %143 = vdwg.mxu0
    %v144 = vmax.f32 %v102, 0.0
    %v145 = vmax.f32 %v115, 0.0
    %v146 = vmax.f32 %v128, 0.0
    %v147 = vmax.f32 %v141, 0.0
    %v148 = vpack.c.bf16 %v144, %v144
    %v149 = vpack.c.bf16 %v145, %v145
    %v150 = vpack.c.bf16 %v146, %v146
    %v151 = vpack.c.bf16 %v147, %v147
    %v152 = vld [vmem:[%s3] sm:$0xff]
    %v153 = vld [vmem:[%s3 + $0x8] sm:$0xff]
    %v154 = vld [vmem:[%s3 + $0x10] sm:$0xff]
    %v155 = vld [vmem:[%s3 + $0x18] sm:$0xff]
    %v156 = vld [vmem:[%s3 + $0x20] sm:$0xff]
    %v157 = vld [vmem:[%s3 + $0x28] sm:$0xff]
    %v158 = vld [vmem:[%s3 + $0x30] sm:$0xff]
    %v159 = vld [vmem:[%s3 + $0x38] sm:$0xff]
    %v160 = vld [vmem:[%s3 + $0x40] sm:$0xff]
    %v161 = vld [vmem:[%s3 + $0x48] sm:$0xff]
    %v162 = vld [vmem:[%s3 + $0x50] sm:$0xff]
    %v163 = vld [vmem:[%s3 + $0x58] sm:$0xff]
    %v164 = vld [vmem:[%s3 + $0x60] sm:$0xff]
    %v165 = vld [vmem:[%s3 + $0x68] sm:$0xff]
    %v166 = vld [vmem:[%s3 + $0x70] sm:$0xff]
    %v167 = vld [vmem:[%s3 + $0x78] sm:$0xff]
    %v168 = vld [vmem:[%s3 + $0x80] sm:$0xff]
    %v169 = vld [vmem:[%s3 + $0x88] sm:$0xff]
    %v170 = vld [vmem:[%s3 + $0x90] sm:$0xff]
    %v171 = vld [vmem:[%s3 + $0x98] sm:$0xff]
    %v172 = vld [vmem:[%s3 + $0xa0] sm:$0xff]
    %v173 = vld [vmem:[%s3 + $0xa8] sm:$0xff]
    %v174 = vld [vmem:[%s3 + $0xb0] sm:$0xff]
    %v175 = vld [vmem:[%s3 + $0xb8] sm:$0xff]
    %v176 = vld [vmem:[%s3 + $0xc0] sm:$0xff]
    %v177 = vld [vmem:[%s3 + $0xc8] sm:$0xff]
    %v178 = vld [vmem:[%s3 + $0xd0] sm:$0xff]
    %v179 = vld [vmem:[%s3 + $0xd8] sm:$0xff]
    %v180 = vld [vmem:[%s3 + $0xe0] sm:$0xff]
    %v181 = vld [vmem:[%s3 + $0xe8] sm:$0xff]
    %v182 = vld [vmem:[%s3 + $0xf0] sm:$0xff]
    %v183 = vld [vmem:[%s3 + $0xf8] sm:$0xff]
    %v184 = vld [vmem:[%s3 + $0x100] sm:$0xff]
    %v185 = vld [vmem:[%s3 + $0x108] sm:$0xff]
    %v186 = vld [vmem:[%s3 + $0x110] sm:$0xff]
    %v187 = vld [vmem:[%s3 + $0x118] sm:$0xff]
    %v188 = vld [vmem:[%s3 + $0x120] sm:$0xff]
    %v189 = vld [vmem:[%s3 + $0x128] sm:$0xff]
    %v190 = vld [vmem:[%s3 + $0x130] sm:$0xff]
    %v191 = vld [vmem:[%s3 + $0x138] sm:$0xff]
    %v192 = vld [vmem:[%s3 + $0x140] sm:$0xff]
    %v193 = vld [vmem:[%s3 + $0x148] sm:$0xff]
    %v194 = vld [vmem:[%s3 + $0x150] sm:$0xff]
    %v195 = vld [vmem:[%s3 + $0x158] sm:$0xff]
    %v196 = vld [vmem:[%s3 + $0x160] sm:$0xff]
    %v197 = vld [vmem:[%s3 + $0x168] sm:$0xff]
    %v198 = vld [vmem:[%s3 + $0x170] sm:$0xff]
    %v199 = vld [vmem:[%s3 + $0x178] sm:$0xff]
    %v200 = vld [vmem:[%s3 + $0x180] sm:$0xff]
    %v201 = vld [vmem:[%s3 + $0x188] sm:$0xff]
    %v202 = vld [vmem:[%s3 + $0x190] sm:$0xff]
    %v203 = vld [vmem:[%s3 + $0x198] sm:$0xff]
    %v204 = vld [vmem:[%s3 + $0x1a0] sm:$0xff]
    %v205 = vld [vmem:[%s3 + $0x1a8] sm:$0xff]
    %v206 = vld [vmem:[%s3 + $0x1b0] sm:$0xff]
    %v207 = vld [vmem:[%s3 + $0x1b8] sm:$0xff]
    %v208 = vld [vmem:[%s3 + $0x1c0] sm:$0xff]
    %v209 = vld [vmem:[%s3 + $0x1c8] sm:$0xff]
    %v210 = vld [vmem:[%s3 + $0x1d0] sm:$0xff]
    %v211 = vld [vmem:[%s3 + $0x1d8] sm:$0xff]
    %v212 = vld [vmem:[%s3 + $0x1e0] sm:$0xff]
    %v213 = vld [vmem:[%s3 + $0x1e8] sm:$0xff]
    %v214 = vld [vmem:[%s3 + $0x1f0] sm:$0xff]
    %v215 = vld [vmem:[%s3 + $0x1f8] sm:$0xff]
    %v216 = vld [vmem:[%s4] sm:$0x3]
    %v218 = vperm.slane %v216, 0
    %v219 = vperm.slane %v216, 1
    %v286 = vunpack.c.l.b16 %v152
    %v287 = vunpack.c.h.b16 %v152
    %v288 = vunpack.c.l.b16 %v153
    %v289 = vunpack.c.h.b16 %v153
    %v290 = vunpack.c.l.b16 %v154
    %v291 = vunpack.c.h.b16 %v154
    %v292 = vunpack.c.l.b16 %v155
    %v293 = vunpack.c.h.b16 %v155
    %v294 = vunpack.c.l.b16 %v156
    %v295 = vunpack.c.h.b16 %v156
    %v296 = vunpack.c.l.b16 %v157
    %v297 = vunpack.c.h.b16 %v157
    %v298 = vunpack.c.l.b16 %v158
    %v299 = vunpack.c.h.b16 %v158
    %v300 = vunpack.c.l.b16 %v159
    %v301 = vunpack.c.h.b16 %v159
    %v302 = vunpack.c.l.b16 %v160
    %v303 = vunpack.c.h.b16 %v160
    %v304 = vunpack.c.l.b16 %v161
    %v305 = vunpack.c.h.b16 %v161
    %v306 = vunpack.c.l.b16 %v162
    %v307 = vunpack.c.h.b16 %v162
    %v308 = vunpack.c.l.b16 %v163
    %v309 = vunpack.c.h.b16 %v163
    %v310 = vunpack.c.l.b16 %v164
    %v311 = vunpack.c.h.b16 %v164
    %v312 = vunpack.c.l.b16 %v165
    %v313 = vunpack.c.h.b16 %v165
    %v314 = vunpack.c.l.b16 %v166
    %v315 = vunpack.c.h.b16 %v166
    %v316 = vunpack.c.l.b16 %v167
    %v317 = vunpack.c.h.b16 %v167
    %v318 = vunpack.c.l.b16 %v168
    %v319 = vunpack.c.h.b16 %v168
    %v320 = vunpack.c.l.b16 %v169
    %v321 = vunpack.c.h.b16 %v169
    %v322 = vunpack.c.l.b16 %v170
    %v323 = vunpack.c.h.b16 %v170
    %v324 = vunpack.c.l.b16 %v171
    %v325 = vunpack.c.h.b16 %v171
    %v326 = vunpack.c.l.b16 %v172
    %v327 = vunpack.c.h.b16 %v172
    %v328 = vunpack.c.l.b16 %v173
    %v329 = vunpack.c.h.b16 %v173
    %v330 = vunpack.c.l.b16 %v174
    %v331 = vunpack.c.h.b16 %v174
    %v332 = vunpack.c.l.b16 %v175
    %v333 = vunpack.c.h.b16 %v175
    %v334 = vunpack.c.l.b16 %v176
    %v335 = vunpack.c.h.b16 %v176
    %v336 = vunpack.c.l.b16 %v177
    %v337 = vunpack.c.h.b16 %v177
    %v338 = vunpack.c.l.b16 %v178
    %v339 = vunpack.c.h.b16 %v178
    %v340 = vunpack.c.l.b16 %v179
    %v341 = vunpack.c.h.b16 %v179
    %v342 = vunpack.c.l.b16 %v180
    %v343 = vunpack.c.h.b16 %v180
    %v344 = vunpack.c.l.b16 %v181
    %v345 = vunpack.c.h.b16 %v181
    %v346 = vunpack.c.l.b16 %v182
    %v347 = vunpack.c.h.b16 %v182
    %v348 = vunpack.c.l.b16 %v183
    %v349 = vunpack.c.h.b16 %v183
    %v350 = vunpack.c.l.b16 %v184
    %v351 = vunpack.c.h.b16 %v184
    %v352 = vunpack.c.l.b16 %v185
    %v353 = vunpack.c.h.b16 %v185
    %v354 = vunpack.c.l.b16 %v186
    %v355 = vunpack.c.h.b16 %v186
    %v356 = vunpack.c.l.b16 %v187
    %v357 = vunpack.c.h.b16 %v187
    %v358 = vunpack.c.l.b16 %v188
    %v359 = vunpack.c.h.b16 %v188
    %v360 = vunpack.c.l.b16 %v189
    %v361 = vunpack.c.h.b16 %v189
    %v362 = vunpack.c.l.b16 %v190
    %v363 = vunpack.c.h.b16 %v190
    %v364 = vunpack.c.l.b16 %v191
    %v365 = vunpack.c.h.b16 %v191
    %v366 = vunpack.c.l.b16 %v192
    %v367 = vunpack.c.h.b16 %v192
    %v368 = vunpack.c.l.b16 %v193
    %v369 = vunpack.c.h.b16 %v193
    %v370 = vunpack.c.l.b16 %v194
    %v371 = vunpack.c.h.b16 %v194
    %v372 = vunpack.c.l.b16 %v195
    %v373 = vunpack.c.h.b16 %v195
    %v374 = vunpack.c.l.b16 %v196
    %v375 = vunpack.c.h.b16 %v196
    %v376 = vunpack.c.l.b16 %v197
    %v377 = vunpack.c.h.b16 %v197
    %v378 = vunpack.c.l.b16 %v198
    %v379 = vunpack.c.h.b16 %v198
    %v380 = vunpack.c.l.b16 %v199
    %v381 = vunpack.c.h.b16 %v199
    %v382 = vunpack.c.l.b16 %v200
    %v383 = vunpack.c.h.b16 %v200
    %v384 = vunpack.c.l.b16 %v201
    %v385 = vunpack.c.h.b16 %v201
    %v386 = vunpack.c.l.b16 %v202
    %v387 = vunpack.c.h.b16 %v202
    %v388 = vunpack.c.l.b16 %v203
    %v389 = vunpack.c.h.b16 %v203
    %v390 = vunpack.c.l.b16 %v204
    %v391 = vunpack.c.h.b16 %v204
    %v392 = vunpack.c.l.b16 %v205
    %v393 = vunpack.c.h.b16 %v205
    %v394 = vunpack.c.l.b16 %v206
    %v395 = vunpack.c.h.b16 %v206
    %v396 = vunpack.c.l.b16 %v207
    %v397 = vunpack.c.h.b16 %v207
    %v398 = vunpack.c.l.b16 %v208
    %v399 = vunpack.c.h.b16 %v208
    %v400 = vunpack.c.l.b16 %v209
    %v401 = vunpack.c.h.b16 %v209
    %v402 = vunpack.c.l.b16 %v210
    %v403 = vunpack.c.h.b16 %v210
    %v404 = vunpack.c.l.b16 %v211
    %v405 = vunpack.c.h.b16 %v211
    %v406 = vunpack.c.l.b16 %v212
    %v407 = vunpack.c.h.b16 %v212
    %v408 = vunpack.c.l.b16 %v213
    %v409 = vunpack.c.h.b16 %v213
    %v410 = vunpack.c.l.b16 %v214
    %v411 = vunpack.c.h.b16 %v214
    %v412 = vunpack.c.l.b16 %v215
    %v413 = vunpack.c.h.b16 %v215
    %v414 = vpack.c.b16 %v288, %v286
    %v415 = vpack.c.b16 %v289, %v287
    %v416 = vpack.c.b16 %v292, %v290
    %v417 = vpack.c.b16 %v293, %v291
    %v418 = vpack.c.b16 %v296, %v294
    %v419 = vpack.c.b16 %v297, %v295
    %v420 = vpack.c.b16 %v300, %v298
    %v421 = vpack.c.b16 %v301, %v299
    %v422 = vpack.c.b16 %v304, %v302
    %v423 = vpack.c.b16 %v305, %v303
    %v424 = vpack.c.b16 %v308, %v306
    %v425 = vpack.c.b16 %v309, %v307
    %v426 = vpack.c.b16 %v312, %v310
    %v427 = vpack.c.b16 %v313, %v311
    %v428 = vpack.c.b16 %v316, %v314
    %v429 = vpack.c.b16 %v317, %v315
    %v430 = vpack.c.b16 %v320, %v318
    %v431 = vpack.c.b16 %v321, %v319
    %v432 = vpack.c.b16 %v324, %v322
    %v433 = vpack.c.b16 %v325, %v323
    %v434 = vpack.c.b16 %v328, %v326
    %v435 = vpack.c.b16 %v329, %v327
    %v436 = vpack.c.b16 %v332, %v330
    %v437 = vpack.c.b16 %v333, %v331
    %v438 = vpack.c.b16 %v336, %v334
    %v439 = vpack.c.b16 %v337, %v335
    %v440 = vpack.c.b16 %v340, %v338
    %v441 = vpack.c.b16 %v341, %v339
    %v442 = vpack.c.b16 %v344, %v342
    %v443 = vpack.c.b16 %v345, %v343
    %v444 = vpack.c.b16 %v348, %v346
    %v445 = vpack.c.b16 %v349, %v347
    %v446 = vpack.c.b16 %v352, %v350
    %v447 = vpack.c.b16 %v353, %v351
    %v448 = vpack.c.b16 %v356, %v354
    %v449 = vpack.c.b16 %v357, %v355
    %v450 = vpack.c.b16 %v360, %v358
    %v451 = vpack.c.b16 %v361, %v359
    %v452 = vpack.c.b16 %v364, %v362
    %v453 = vpack.c.b16 %v365, %v363
    %v454 = vpack.c.b16 %v368, %v366
    %v455 = vpack.c.b16 %v369, %v367
    %v456 = vpack.c.b16 %v372, %v370
    %v457 = vpack.c.b16 %v373, %v371
    %v458 = vpack.c.b16 %v376, %v374
    %v459 = vpack.c.b16 %v377, %v375
    %v460 = vpack.c.b16 %v380, %v378
    %v461 = vpack.c.b16 %v381, %v379
    %v462 = vpack.c.b16 %v384, %v382
    %v463 = vpack.c.b16 %v385, %v383
    %v464 = vpack.c.b16 %v388, %v386
    %v465 = vpack.c.b16 %v389, %v387
    %v466 = vpack.c.b16 %v392, %v390
    %v467 = vpack.c.b16 %v393, %v391
    %v468 = vpack.c.b16 %v396, %v394
    %v469 = vpack.c.b16 %v397, %v395
    %v470 = vpack.c.b16 %v400, %v398
    %v471 = vpack.c.b16 %v401, %v399
    %v472 = vpack.c.b16 %v404, %v402
    %v473 = vpack.c.b16 %v405, %v403
    %v474 = vpack.c.b16 %v408, %v406
    %v475 = vpack.c.b16 %v409, %v407
    %v476 = vpack.c.b16 %v412, %v410
    %v477 = vpack.c.b16 %v413, %v411
    %542 = vmatpush.bf16.msra.mxu0 %v428
    %543 = vmatpush.bf16.msra.mxu0 %v426
    %544 = vmatpush.bf16.msra.mxu0 %v424
    %545 = vmatpush.bf16.msra.mxu0 %v422
    %546 = vmatpush.bf16.msra.mxu0 %v420
    %547 = vmatpush.bf16.msra.mxu0 %v418
    %548 = vmatpush.bf16.msra.mxu0 %v416
    %549 = vmatpush.bf16.msra.mxu0 %v414
    %550 = vmatmul.bf16.gmra.mxu0 %v148
    %v551 = vpop.f32.mrf.mxu0
    %v552 = vadd.f32 %v218, %v551
    %v553 = vpop.f32.mrf.mxu0
    %554 = vdwg.mxu0
    %555 = vmatpush.bf16.msra.mxu0 %v444
    %556 = vmatpush.bf16.msra.mxu0 %v442
    %557 = vmatpush.bf16.msra.mxu0 %v440
    %558 = vmatpush.bf16.msra.mxu0 %v438
    %559 = vmatpush.bf16.msra.mxu0 %v436
    %560 = vmatpush.bf16.msra.mxu0 %v434
    %561 = vmatpush.bf16.msra.mxu0 %v432
    %562 = vmatpush.bf16.msra.mxu0 %v430
    %563 = vmatmul.bf16.gmra.mxu0 %v149
    %v564 = vpop.f32.mrf.mxu0
    %v565 = vadd.f32 %v552, %v564
    %v566 = vpop.f32.mrf.mxu0
    %567 = vdwg.mxu0
    %568 = vmatpush.bf16.msra.mxu0 %v460
    %569 = vmatpush.bf16.msra.mxu0 %v458
    %570 = vmatpush.bf16.msra.mxu0 %v456
    %571 = vmatpush.bf16.msra.mxu0 %v454
    %572 = vmatpush.bf16.msra.mxu0 %v452
    %573 = vmatpush.bf16.msra.mxu0 %v450
    %574 = vmatpush.bf16.msra.mxu0 %v448
    %575 = vmatpush.bf16.msra.mxu0 %v446
    %576 = vmatmul.bf16.gmra.mxu0 %v150
    %v577 = vpop.f32.mrf.mxu0
    %v578 = vadd.f32 %v565, %v577
    %v579 = vpop.f32.mrf.mxu0
    %580 = vdwg.mxu0
    %581 = vmatpush.bf16.msra.mxu0 %v476
    %582 = vmatpush.bf16.msra.mxu0 %v474
    %583 = vmatpush.bf16.msra.mxu0 %v472
    %584 = vmatpush.bf16.msra.mxu0 %v470
    %585 = vmatpush.bf16.msra.mxu0 %v468
    %586 = vmatpush.bf16.msra.mxu0 %v466
    %587 = vmatpush.bf16.msra.mxu0 %v464
    %588 = vmatpush.bf16.msra.mxu0 %v462
    %589 = vmatmul.bf16.gmra.mxu0 %v151
    %v590 = vpop.f32.mrf.mxu0
    %v591 = vadd.f32 %v578, %v590
    %v592 = vpop.f32.mrf.mxu0
    %593 = vdwg.mxu0
    %594 = vmatpush.bf16.msra.mxu0 %v429
    %595 = vmatpush.bf16.msra.mxu0 %v427
    %596 = vmatpush.bf16.msra.mxu0 %v425
    %597 = vmatpush.bf16.msra.mxu0 %v423
    %598 = vmatpush.bf16.msra.mxu0 %v421
    %599 = vmatpush.bf16.msra.mxu0 %v419
    %600 = vmatpush.bf16.msra.mxu0 %v417
    %601 = vmatpush.bf16.msra.mxu0 %v415
    %602 = vmatmul.bf16.gmra.mxu0 %v148
    %v603 = vpop.f32.mrf.mxu0
    %v604 = vadd.f32 %v219, %v603
    %v605 = vpop.f32.mrf.mxu0
    %606 = vdwg.mxu0
    %607 = vmatpush.bf16.msra.mxu0 %v445
    %608 = vmatpush.bf16.msra.mxu0 %v443
    %609 = vmatpush.bf16.msra.mxu0 %v441
    %610 = vmatpush.bf16.msra.mxu0 %v439
    %611 = vmatpush.bf16.msra.mxu0 %v437
    %612 = vmatpush.bf16.msra.mxu0 %v435
    %613 = vmatpush.bf16.msra.mxu0 %v433
    %614 = vmatpush.bf16.msra.mxu0 %v431
    %615 = vmatmul.bf16.gmra.mxu0 %v149
    %v616 = vpop.f32.mrf.mxu0
    %v617 = vadd.f32 %v604, %v616
    %v618 = vpop.f32.mrf.mxu0
    %619 = vdwg.mxu0
    %620 = vmatpush.bf16.msra.mxu0 %v461
    %621 = vmatpush.bf16.msra.mxu0 %v459
    %622 = vmatpush.bf16.msra.mxu0 %v457
    %623 = vmatpush.bf16.msra.mxu0 %v455
    %624 = vmatpush.bf16.msra.mxu0 %v453
    %625 = vmatpush.bf16.msra.mxu0 %v451
    %626 = vmatpush.bf16.msra.mxu0 %v449
    %627 = vmatpush.bf16.msra.mxu0 %v447
    %628 = vmatmul.bf16.gmra.mxu0 %v150
    %v629 = vpop.f32.mrf.mxu0
    %v630 = vadd.f32 %v617, %v629
    %v631 = vpop.f32.mrf.mxu0
    %632 = vdwg.mxu0
    %633 = vmatpush.bf16.msra.mxu0 %v477
    %634 = vmatpush.bf16.msra.mxu0 %v475
    %635 = vmatpush.bf16.msra.mxu0 %v473
    %636 = vmatpush.bf16.msra.mxu0 %v471
    %637 = vmatpush.bf16.msra.mxu0 %v469
    %638 = vmatpush.bf16.msra.mxu0 %v467
    %639 = vmatpush.bf16.msra.mxu0 %v465
    %640 = vmatpush.bf16.msra.mxu0 %v463
    %641 = vmatmul.bf16.gmra.mxu0 %v151
    %v642 = vpop.f32.mrf.mxu0
    %v643 = vadd.f32 %v630, %v642
    %v644 = vpop.f32.mrf.mxu0
    %645 = vdwg.mxu0
    %v646 = vmax.f32 %v591, 0.0
    %v647 = vmax.f32 %v643, 0.0
    %v648 = vpack.c.bf16 %v646, %v646
    %v649 = vpack.c.bf16 %v647, %v647
    %v650 = vld [vmem:[%s5] sm:$0xf]
    %v651 = vld [vmem:[%s5 + $0x4] sm:$0xf]
    %v652 = vld [vmem:[%s5 + $0x8] sm:$0xf]
    %v653 = vld [vmem:[%s5 + $0xc] sm:$0xf]
    %v654 = vld [vmem:[%s5 + $0x10] sm:$0xf]
    %v655 = vld [vmem:[%s5 + $0x14] sm:$0xf]
    %v656 = vld [vmem:[%s5 + $0x18] sm:$0xf]
    %v657 = vld [vmem:[%s5 + $0x1c] sm:$0xf]
    %v658 = vld [vmem:[%s5 + $0x20] sm:$0xf]
    %v659 = vld [vmem:[%s5 + $0x24] sm:$0xf]
    %v660 = vld [vmem:[%s5 + $0x28] sm:$0xf]
    %v661 = vld [vmem:[%s5 + $0x2c] sm:$0xf]
    %v662 = vld [vmem:[%s5 + $0x30] sm:$0xf]
    %v663 = vld [vmem:[%s5 + $0x34] sm:$0xf]
    %v664 = vld [vmem:[%s5 + $0x38] sm:$0xf]
    %v665 = vld [vmem:[%s5 + $0x3c] sm:$0xf]
    %v666 = vld [vmem:[%s5 + $0x40] sm:$0xf]
    %v667 = vld [vmem:[%s5 + $0x44] sm:$0xf]
    %v668 = vld [vmem:[%s5 + $0x48] sm:$0xf]
    %v669 = vld [vmem:[%s5 + $0x4c] sm:$0xf]
    %v670 = vld [vmem:[%s5 + $0x50] sm:$0xf]
    %v671 = vld [vmem:[%s5 + $0x54] sm:$0xf]
    %v672 = vld [vmem:[%s5 + $0x58] sm:$0xf]
    %v673 = vld [vmem:[%s5 + $0x5c] sm:$0xf]
    %v674 = vld [vmem:[%s5 + $0x60] sm:$0xf]
    %v675 = vld [vmem:[%s5 + $0x64] sm:$0xf]
    %v676 = vld [vmem:[%s5 + $0x68] sm:$0xf]
    %v677 = vld [vmem:[%s5 + $0x6c] sm:$0xf]
    %v678 = vld [vmem:[%s5 + $0x70] sm:$0xf]
    %v679 = vld [vmem:[%s5 + $0x74] sm:$0xf]
    %v680 = vld [vmem:[%s5 + $0x78] sm:$0xf]
    %v681 = vld [vmem:[%s5 + $0x7c] sm:$0xf]
    %v682 = vld [vmem:[%s6] sm:$0x1]
    %v684 = vperm.slane %v682, 0
    %v718 = vunpack.c.l.b16 %v650
    %v719 = vunpack.c.l.b16 %v651
    %v720 = vunpack.c.l.b16 %v652
    %v721 = vunpack.c.l.b16 %v653
    %v722 = vunpack.c.l.b16 %v654
    %v723 = vunpack.c.l.b16 %v655
    %v724 = vunpack.c.l.b16 %v656
    %v725 = vunpack.c.l.b16 %v657
    %v726 = vunpack.c.l.b16 %v658
    %v727 = vunpack.c.l.b16 %v659
    %v728 = vunpack.c.l.b16 %v660
    %v729 = vunpack.c.l.b16 %v661
    %v730 = vunpack.c.l.b16 %v662
    %v731 = vunpack.c.l.b16 %v663
    %v732 = vunpack.c.l.b16 %v664
    %v733 = vunpack.c.l.b16 %v665
    %v734 = vunpack.c.l.b16 %v666
    %v735 = vunpack.c.l.b16 %v667
    %v736 = vunpack.c.l.b16 %v668
    %v737 = vunpack.c.l.b16 %v669
    %v738 = vunpack.c.l.b16 %v670
    %v739 = vunpack.c.l.b16 %v671
    %v740 = vunpack.c.l.b16 %v672
    %v741 = vunpack.c.l.b16 %v673
    %v742 = vunpack.c.l.b16 %v674
    %v743 = vunpack.c.l.b16 %v675
    %v744 = vunpack.c.l.b16 %v676
    %v745 = vunpack.c.l.b16 %v677
    %v746 = vunpack.c.l.b16 %v678
    %v747 = vunpack.c.l.b16 %v679
    %v748 = vunpack.c.l.b16 %v680
    %v749 = vunpack.c.l.b16 %v681
    %v750 = vpack.c.b16 %v719, %v718
    %v751 = vpack.c.b16 %v721, %v720
    %v752 = vpack.c.b16 %v723, %v722
    %v753 = vpack.c.b16 %v725, %v724
    %v754 = vpack.c.b16 %v727, %v726
    %v755 = vpack.c.b16 %v729, %v728
    %v756 = vpack.c.b16 %v731, %v730
    %v757 = vpack.c.b16 %v733, %v732
    %v758 = vpack.c.b16 %v735, %v734
    %v759 = vpack.c.b16 %v737, %v736
    %v760 = vpack.c.b16 %v739, %v738
    %v761 = vpack.c.b16 %v741, %v740
    %v762 = vpack.c.b16 %v743, %v742
    %v763 = vpack.c.b16 %v745, %v744
    %v764 = vpack.c.b16 %v747, %v746
    %v765 = vpack.c.b16 %v749, %v748
    %782 = vmatpush.bf16.msra.mxu0 %v757
    %783 = vmatpush.bf16.msra.mxu0 %v756
    %784 = vmatpush.bf16.msra.mxu0 %v755
    %785 = vmatpush.bf16.msra.mxu0 %v754
    %786 = vmatpush.bf16.msra.mxu0 %v753
    %787 = vmatpush.bf16.msra.mxu0 %v752
    %788 = vmatpush.bf16.msra.mxu0 %v751
    %789 = vmatpush.bf16.msra.mxu0 %v750
    %790 = vmatmul.bf16.gmra.mxu0 %v648
    %v791 = vpop.f32.mrf.mxu0
    %v792 = vadd.f32 %v684, %v791
    %v793 = vpop.f32.mrf.mxu0
    %794 = vdwg.mxu0
    %795 = vmatpush.bf16.msra.mxu0 %v765
    %796 = vmatpush.bf16.msra.mxu0 %v764
    %797 = vmatpush.bf16.msra.mxu0 %v763
    %798 = vmatpush.bf16.msra.mxu0 %v762
    %799 = vmatpush.bf16.msra.mxu0 %v761
    %800 = vmatpush.bf16.msra.mxu0 %v760
    %801 = vmatpush.bf16.msra.mxu0 %v759
    %802 = vmatpush.bf16.msra.mxu0 %v758
    %803 = vmatmul.bf16.gmra.mxu0 %v649
    %v804 = vpop.f32.mrf.mxu0
    %v805 = vadd.f32 %v792, %v804
    %v806 = vpop.f32.mrf.mxu0
    %807 = vdwg.mxu0
    %v808 = vpack.c.bf16 %v805, %v805
    %809 = vst [vmem:[#allocation2] sm:$0xf] %v808
    // Predicated region
    $region30: #{nn_forward.1} parent=1 // pred_check
      _
    $region31: #{nn_forward.1} parent=1 // pred_check_branch
      %811 = sbr.rel (0) target = $region33
    $region32: #{nn_forward.1} parent=1 // pred_region
      %813 = vsyncadd [#allocation3], 0
      %s815 = sshll.u32 [#allocation2], 4
      %s816 = int_to_ptr.vmem [resolvable:$true] %s815
      %s817 = sshll.u32 %s7, 4
      %s818 = int_to_ptr.hbm [resolvable:$true] %s817
      %820 = dma.vmem_to_hbm [thread:$0]  %s816, 64, %s818, [#allocation3]
    $region33: #{nn_forward.1} parent=1 // pred_fallthru
      _
    // Predicated region
    $region34: #{nn_forward.1} parent=1 // pred_check
      _
    $region35: #{nn_forward.1} parent=1 // pred_check_branch
      %822 = sbr.rel (0) target = $region37
    $region36: #{nn_forward.1} parent=1 // pred_region
      %824 = dma.done [#allocation3], 64
    $region37: #{nn_forward.1} parent=1 // pred_fallthru
      _
    %825 = vsyncpa [#allocation3], 1

</llo_original>
